<compile_context>
chip_gen: v7x
topology: tpu7x:2x2x1
jax: 0.10.0
libtpu: 0.0.40
codegen_flags: <defaults>
</compile_context>

<pallas_src>
import jax
import jax.numpy as jnp
from jax.experimental import pallas as pl
from jax.experimental.pallas import tpu as pltpu


def _cdiv(a: int, b: int) -> int:
    return -(-a // b)


def _round_up(x: int, m: int) -> int:
    return _cdiv(x, m) * m


def generator_kernel(x_ref, w1_ref, b1_ref, w2_ref, b2_ref, o_ref, h_ref):
    # Layer 1 (Linear + ReLU): compute once per batch tile (j == 0) into a
    # VMEM scratch and reuse it for every N tile of this batch tile.
    @pl.when(pl.program_id(1) == 0)
    def _():
        x = x_ref[...].astype(jnp.bfloat16)          # cast in-kernel (no HBM pass)
        h = jnp.dot(x, w1_ref[...], preferred_element_type=jnp.float32)
        h_ref[...] = jnp.maximum(h + b1_ref[...], 0.0)

    # Layer 2 (Linear + Tanh) for the current N tile.
    y = jnp.dot(h_ref[...].astype(jnp.bfloat16), w2_ref[...],
                preferred_element_type=jnp.float32)
    o_ref[...] = jnp.tanh(y + b2_ref[...]).astype(o_ref.dtype)


def prepare_params(w1, b1, w2, b2):
    """One-time cast/reshape of the Generator parameters — cache the result.

    w1: (latent, 256), b1: (256,), w2: (256, image_dim), b2: (image_dim,)
    (weights are the transposed view of PyTorch nn.Linear's (out, in) layout).
    """
    hidden = w1.shape[1]
    image_dim = w2.shape[1]
    return (w1.astype(jnp.bfloat16),
            b1.reshape(1, hidden).astype(jnp.float32),
            w2.astype(jnp.bfloat16),
            b2.reshape(1, image_dim).astype(jnp.float32))


def generator_forward(x, w1, b1, w2, b2, *, block_b: int = 256,
                      block_n: int = 1024):
    """Generator forward: x (B, latent) -> (B, image_dim), dtype == x.dtype.

    w1/b1/w2/b2 must come from `prepare_params` (cast once, reused per call).
    """
    B, latent = x.shape
    hidden = w1.shape[1]
    image_dim = w2.shape[1]
    assert w2.shape[0] == hidden and b1.shape == (1, hidden)
    assert b2.shape == (1, image_dim)

    # Batch tile: multiple of 16 (bf16 sublane packing), and at least 2 grid
    # steps when B allows so the "parallel" axis shards across v7x's two
    # TensorCores; this also keeps last-tile padding waste small.
    block_b = max(16, (block_b // 16) * 16)
    tb = min(block_b, _round_up(B, 16))
    if B >= 32:
        tb = min(tb, _round_up(_cdiv(B, 2), 16))
    grid_b = _cdiv(B, tb)

    # N tile: full image_dim when small (single tile, no padding at all),
    # otherwise a lane-dense multiple of 128 that fits default scoped VMEM.
    block_n = max(128, (block_n // 128) * 128)
    tn = image_dim if image_dim <= block_n else block_n
    grid_n = _cdiv(image_dim, tn)

    # Constant-index-map operands are never re-fetched: single-buffer them.
    resident = pl.Buffered(1)
    w2_mode = pl.Buffered(1) if grid_n == 1 else None

    def spec(shape, index_map, mode=None):
        if mode is None:
            return pl.BlockSpec(shape, index_map)
        return pl.BlockSpec(shape, index_map, pipeline_mode=mode)

    out_dtype = x.dtype
    cost = pl.CostEstimate(
        flops=2 * B * (latent * hidden + hidden * image_dim),
        transcendentals=B * image_dim,
        bytes_accessed=int(x.size * x.dtype.itemsize
                           + w1.size * w1.dtype.itemsize
                           + b1.size * b1.dtype.itemsize
                           + w2.size * w2.dtype.itemsize
                           + b2.size * b2.dtype.itemsize
                           + B * image_dim * jnp.dtype(out_dtype).itemsize),
    )

    return pl.pallas_call(
        generator_kernel,
        out_shape=jax.ShapeDtypeStruct((B, image_dim), out_dtype),
        grid_spec=pltpu.PrefetchScalarGridSpec(
            num_scalar_prefetch=0,
            grid=(grid_b, grid_n),
            in_specs=[
                pl.BlockSpec((tb, latent), lambda i, j: (i, 0)),        # x
                spec((latent, hidden), lambda i, j: (0, 0), resident),  # w1
                spec((1, hidden), lambda i, j: (0, 0), resident),       # b1
                spec((hidden, tn), lambda i, j: (0, j), w2_mode),       # w2
                spec((1, tn), lambda i, j: (0, j), w2_mode),            # b2
            ],
            out_specs=pl.BlockSpec((tb, tn), lambda i, j: (i, j)),
            scratch_shapes=[pltpu.VMEM((tb, hidden), jnp.float32)],     # hidden act
        ),
        compiler_params=pltpu.CompilerParams(
            # Batch shards across TensorCores (v7x); the N axis must iterate
            # sequentially so the hidden-activation scratch carry is valid.
            dimension_semantics=("parallel", "arbitrary"),
        ),
        cost_estimate=cost,
    )(x, w1, b1, w2, b2)


def init_params(key, latent_dim, image_dim, hidden=256, dtype=jnp.float32):
    """Deterministic synthetic init mimicking nn.Linear's uniform init."""
    k1, k2, k3, k4 = jax.random.split(key, 4)
    lim1 = 1.0 / jnp.sqrt(latent_dim)
    lim2 = 1.0 / jnp.sqrt(hidden)
    w1 = jax.random.uniform(k1, (latent_dim, hidden), dtype, -lim1, lim1)
    b1 = jax.random.uniform(k2, (hidden,), dtype, -lim1, lim1)
    w2 = jax.random.uniform(k3, (hidden, image_dim), dtype, -lim2, lim2)
    b2 = jax.random.uniform(k4, (image_dim,), dtype, -lim2, lim2)
    return w1, b1, w2, b2


if __name__ == "__main__":
    batch = 32
    latent_dim = 64
    image_dim = 784  # 28x28 flattened image (exercises a non-128-multiple N)

    key = jax.random.PRNGKey(0)
    kx, kp = jax.random.split(key)
    x = jax.random.normal(kx, (batch, latent_dim), dtype=jnp.float32)
    w1, b1, w2, b2 = init_params(kp, latent_dim, image_dim)

    params = prepare_params(w1, b1, w2, b2)   # cast once, reuse across calls
    out = generator_forward(x, *params)
    out = jax.block_until_ready(out)
    assert out.shape == (batch, image_dim) and out.dtype == x.dtype

    # Reference with the same bf16-input / f32-accumulate math as the kernel.
    bf16 = jnp.bfloat16
    h_ref = jnp.maximum(
        jnp.dot(x.astype(bf16), w1.astype(bf16),
                preferred_element_type=jnp.float32) + b1, 0.0)
    ref = jnp.tanh(
        jnp.dot(h_ref.astype(bf16), w2.astype(bf16),
                preferred_element_type=jnp.float32) + b2)
    assert jnp.allclose(out.astype(jnp.float32), ref, atol=5e-3, rtol=5e-3)

    # Loose sanity check against the full-f32 PyTorch-equivalent forward.
    ref_f32 = jnp.tanh(jnp.maximum(x @ w1 + b1, 0.0) @ w2 + b2)
    assert jnp.allclose(out.astype(jnp.float32), ref_f32, atol=3e-2, rtol=3e-2)

    print("KERNEL_OK")
</pallas_src>

<mosaic_0001>
module attributes {stable_mosaic.version = 11 : i64} {
  func.func @generator_kernel(%arg0: i32, %arg1: i32, %arg2: memref<16x64xf32, #tpu.memory_space<vmem>>, %arg3: memref<64x256xbf16, #tpu.memory_space<vmem>>, %arg4: memref<1x256xf32, #tpu.memory_space<vmem>>, %arg5: memref<256x784xbf16, #tpu.memory_space<vmem>>, %arg6: memref<1x784xf32, #tpu.memory_space<vmem>>, %arg7: memref<16x784xf32, #tpu.memory_space<vmem>>, %arg8: memref<16x256xf32, #tpu.memory_space<vmem>>) attributes {dimension_semantics = [#tpu.dimension_semantics<parallel>, #tpu.dimension_semantics<arbitrary>], iteration_bounds = array<i64: 2, 1>, scalar_prefetch = 0 : i64, scratch_operands = 1 : i64, tpu.core_type = #tpu.core_type<tc>, window_params = [{transform_indices = @transform_0, window_bounds = array<i64: 16, 64>}, {pipeline_mode = #tpu.pipeline_mode<synchronous>, transform_indices = @transform_1, window_bounds = array<i64: 64, 256>}, {pipeline_mode = #tpu.pipeline_mode<synchronous>, transform_indices = @transform_2, window_bounds = array<i64: 1, 256>}, {pipeline_mode = #tpu.pipeline_mode<synchronous>, transform_indices = @transform_3, window_bounds = array<i64: 256, 784>}, {pipeline_mode = #tpu.pipeline_mode<synchronous>, transform_indices = @transform_4, window_bounds = array<i64: 1, 784>}, {transform_indices = @transform_5, window_bounds = array<i64: 16, 784>}]} {
    %c0_i32 = arith.constant 0 : i32
    %0 = arith.cmpi eq, %arg1, %c0_i32 : i32
    %1 = arith.extui %0 : i1 to i32
    %c0_i32_0 = arith.constant 0 : i32
    %2 = arith.cmpi ne, %1, %c0_i32_0 : i32
    scf.if %2 {
      %c0_8 = arith.constant 0 : index
      %c0_9 = arith.constant 0 : index
      %12 = vector.load %arg2[%c0_8, %c0_9] : memref<16x64xf32, #tpu.memory_space<vmem>>, vector<16x64xf32>
      %13 = arith.truncf %12 : vector<16x64xf32> to vector<16x64xbf16>
      %c0_10 = arith.constant 0 : index
      %c0_11 = arith.constant 0 : index
      %14 = vector.load %arg3[%c0_10, %c0_11] : memref<64x256xbf16, #tpu.memory_space<vmem>>, vector<64x256xbf16>
      %cst_12 = arith.constant dense<0.000000e+00> : vector<16x256xf32>
      %15 = tpu.matmul %13, %14, %cst_12 {dimension_numbers = #tpu.dot_dimension_numbers<[1], [0], [0], [1], [0, 0, 1, 1], [], []>} : vector<16x64xbf16>, vector<64x256xbf16>, vector<16x256xf32> -> vector<16x256xf32>
      %c0_13 = arith.constant 0 : index
      %c0_14 = arith.constant 0 : index
      %16 = vector.load %arg4[%c0_13, %c0_14] : memref<1x256xf32, #tpu.memory_space<vmem>>, vector<1x256xf32>
      %17 = vector.broadcast %16 : vector<1x256xf32> to vector<16x256xf32>
      %18 = arith.addf %15, %17 : vector<16x256xf32>
      %cst_15 = arith.constant 0.000000e+00 : f32
      %19 = vector.broadcast %cst_15 : f32 to vector<16x256xf32>
      %20 = arith.maximumf %18, %19 : vector<16x256xf32>
      %c0_16 = arith.constant 0 : index
      %c0_17 = arith.constant 0 : index
      %21 = vector.load %arg8[%c0_16, %c0_17] : memref<16x256xf32, #tpu.memory_space<vmem>>, vector<16x256xf32>
      tpu.vector_store %arg8[%c0_16, %c0_17], %20 {strides = array<i32>} : memref<16x256xf32, #tpu.memory_space<vmem>>, vector<16x256xf32>,
    } else {
    }
    %c0 = arith.constant 0 : index
    %c0_1 = arith.constant 0 : index
    %3 = vector.load %arg8[%c0, %c0_1] : memref<16x256xf32, #tpu.memory_space<vmem>>, vector<16x256xf32>
    %4 = arith.truncf %3 : vector<16x256xf32> to vector<16x256xbf16>
    %c0_2 = arith.constant 0 : index
    %c0_3 = arith.constant 0 : index
    %5 = vector.load %arg5[%c0_2, %c0_3] : memref<256x784xbf16, #tpu.memory_space<vmem>>, vector<256x784xbf16>
    %cst = arith.constant dense<0.000000e+00> : vector<16x784xf32>
    %6 = tpu.matmul %4, %5, %cst {dimension_numbers = #tpu.dot_dimension_numbers<[1], [0], [0], [1], [0, 0, 1, 1], [], []>} : vector<16x256xbf16>, vector<256x784xbf16>, vector<16x784xf32> -> vector<16x784xf32>
    %c0_4 = arith.constant 0 : index
    %c0_5 = arith.constant 0 : index
    %7 = vector.load %arg6[%c0_4, %c0_5] : memref<1x784xf32, #tpu.memory_space<vmem>>, vector<1x784xf32>
    %8 = vector.broadcast %7 : vector<1x784xf32> to vector<16x784xf32>
    %9 = arith.addf %6, %8 : vector<16x784xf32>
    %10 = math.tanh %9 : vector<16x784xf32>
    %c0_6 = arith.constant 0 : index
    %c0_7 = arith.constant 0 : index
    %11 = vector.load %arg7[%c0_6, %c0_7] : memref<16x784xf32, #tpu.memory_space<vmem>>, vector<16x784xf32>
    tpu.vector_store %arg7[%c0_6, %c0_7], %10 {strides = array<i32>} : memref<16x784xf32, #tpu.memory_space<vmem>>, vector<16x784xf32>,
    return
  }
  func.func @transform_0(%arg0: i32, %arg1: i32) -> (i32, i32) {
    %c0_i32 = arith.constant 0 : i32
    %c0_i32_0 = arith.constant 0 : i32
    return %arg0, %c0_i32 : i32, i32
  }
  func.func @transform_1(%arg0: i32, %arg1: i32) -> (i32, i32) {
    %c0_i32 = arith.constant 0 : i32
    %c0_i32_0 = arith.constant 0 : i32
    %c0_i32_1 = arith.constant 0 : i32
    return %c0_i32, %c0_i32_0 : i32, i32
  }
  func.func @transform_2(%arg0: i32, %arg1: i32) -> (i32, i32) {
    %c0_i32 = arith.constant 0 : i32
    %c0_i32_0 = arith.constant 0 : i32
    %c0_i32_1 = arith.constant 0 : i32
    return %c0_i32, %c0_i32_0 : i32, i32
  }
  func.func @transform_3(%arg0: i32, %arg1: i32) -> (i32, i32) {
    %c0_i32 = arith.constant 0 : i32
    %c0_i32_0 = arith.constant 0 : i32
    return %c0_i32, %arg1 : i32, i32
  }
  func.func @transform_4(%arg0: i32, %arg1: i32) -> (i32, i32) {
    %c0_i32 = arith.constant 0 : i32
    %c0_i32_0 = arith.constant 0 : i32
    return %c0_i32, %arg1 : i32, i32
  }
  func.func @transform_5(%arg0: i32, %arg1: i32) -> (i32, i32) {
    %c0_i32 = arith.constant 0 : i32
    return %arg0, %arg1 : i32, i32
  }
}

</mosaic_0001>

<llo_original>
// kernel: tpu_custom_call.1
$region0: #{tpu_custom_call.1}
  #allocation0 [shape = 'u32[]', space=smem, size = 0x4, offset = 0x4, fixed_abs, tag = 'smem constant byte address 0x4 - core index']
  #allocation1 [shape = 'u32[144,128]{1,0:T(1,128)}', space=vmem, size = 0x12000, scoped, tag = 'internal scratch']
  #allocation2 [shape = 'f32[16,256]{1,0:T(8,128)}', space=vmem, size = 0x4000, scoped, tag = 'scratch operand']
  %s0 = inlined_call_operand.vmem [shape: f32[32,64], index: 0, kind: input, shape index: {}]
  %s1 = inlined_call_operand.vmem [shape: bf16[64,256], index: 1, kind: input, shape index: {}]
  %s2 = inlined_call_operand.vmem [shape: f32[1,256], index: 2, kind: input, shape index: {}]
  %s3 = inlined_call_operand.vmem [shape: bf16[256,784], index: 3, kind: input, shape index: {}]
  %s4 = inlined_call_operand.vmem [shape: f32[1,784], index: 4, kind: input, shape index: {}]
  %s5 = inlined_call_operand.hbm [shape: f32[32,784], index: 5, kind: output, shape index: {}]
  %s6 = sld [smem:[#allocation0]]
  $region57: #{tpu_custom_call.1} parent=0
    _
  %s8 = ssub.s32 1, %s6
  %s9 = scalar_select 0, %s8, %s6
  $region1: #{tpu_custom_call.1} parent=0
    #allocation3 [shape = 'u8[114688]{0}', space=vmem, size = 0x1c000, scoped, tag = 'output window, operand 0']
    #allocation4 [shape = 's32[2]{0}', space=sflag, size = 0x8, scoped, tag = 'scoped memory for tpu_custom_call.1']
    %10 = vsyncpa [#allocation4], 0
    %s11 = scalar_lea.sflag [#allocation4], 1
    %12 = vsyncpa %s11, 0
    loop: start=0, step=1, limit=4
    $region2: #{tpu_custom_call.1} parent=1 // loop_pre_header
      _
    $region3: #{tpu_custom_call.1} parent=1 // loop_header
      %s14 = sphi 0, %s18
      %p15 = scmp.ge.s32.totalorder %s14, 4
      %s21 = sphi 0, %s33
      %s22 = sphi 0, %s29
      %s23 = sphi 0, %s21
      %s24 = sphi 0, %s22
      %s25 = sphi 0, %s23
      %s26 = sphi 0, %s24
      %s36 = sphi 0, %s38
      %s39 = sphi 0, %s36
      %s40 = sphi 0, %s39
      %s56 = sphi 0, %s40
      %s60 = sphi 0, %s60
      %s62 = sphi 0, %s60
      %s63 = sphi 0, %s62
      %s77 = sphi 0, %s63
      %s81 = sphi 0, %s81
      %s83 = sphi 0, %s81
      %s84 = sphi 0, %s83
      %s98 = sphi 0, %s84
      %s104 = sphi 0, %s106
      %s107 = sphi 0, %s104
      %s108 = sphi 0, %s107
      %s124 = sphi 0, %s108
      %s130 = sphi 0, %s132
      %s133 = sphi 0, %s130
      %s134 = sphi 0, %s133
      %s150 = sphi 0, %s134
      %s158 = sphi 0, %s160
      %s161 = sphi 0, %s158
      %s162 = sphi 0, %s161
      %s178 = sphi 0, %s162
    $region4: #{tpu_custom_call.1} parent=1 // loop_header_branch
      %17 = sbr.rel (%p15) target = $region8
    $region5: #{tpu_custom_call.1} parent=1 // loop_body
      %s19 = ssub.s32 %s14, 1
      %s20 = ssub.s32 %s14, 2
      %s27 = sadd.s32 1, %s22
      %p28 = scmp.ge.s32.totalorder %s27, 1
      %s29 = scalar_select %p28, 0, %s27
      %s30 = sadd.s32 1, %s21
      %s31 = scalar_select %p28, %s30, %s21
      %p32 = scmp.ge.s32.totalorder %s31, 2
      %s33 = scalar_select %p32, 0, %s31
      %s34 = ssub.s32 %s21, %s33
      %p35 = scmp.eq.s32.totalorder %s34, 0
      %s37 = sadd.s32 %s36, 1
      %s38 = scalar_select %p35, %s36, %s37
      %p41 = pneg %p35
      %p42 = scmp.eq.s32.totalorder %s14, 1
      %p43 = por %p41, %p42
      %p44 = scmp.ne.s32.totalorder %s36, %s39
      %p45 = scmp.eq.s32.totalorder %s14, 0
      %p46 = por %p44, %p45
      %p47 = scmp.ne.s32.totalorder %s36, %s39
      %p48 = scmp.eq.s32.totalorder %s19, 1
      %p49 = por %p47, %p48
      %p50 = scmp.ne.s32.totalorder %s39, %s40
      %p51 = scmp.eq.s32.totalorder %s19, 0
      %p52 = por %p50, %p51
      %p53 = scmp.ne.s32.totalorder %s39, %s40
      %p54 = scmp.eq.s32.totalorder %s20, 1
      %p55 = por %p53, %p54
      %p57 = scmp.ne.s32.totalorder %s40, %s56
      %p58 = scmp.eq.s32.totalorder %s20, 0
      %p59 = por %p57, %p58
      %s61 = sadd.s32 %s60, 1
      %p64 = scmp.eq.s32.totalorder %s14, 1
      %p65 = scmp.ne.s32.totalorder %s60, %s62
      %p66 = scmp.eq.s32.totalorder %s14, 0
      %p67 = por %p65, %p66
      %p68 = scmp.ne.s32.totalorder %s60, %s62
      %p69 = scmp.eq.s32.totalorder %s19, 1
      %p70 = por %p68, %p69
      %p71 = scmp.ne.s32.totalorder %s62, %s63
      %p72 = scmp.eq.s32.totalorder %s19, 0
      %p73 = por %p71, %p72
      %p74 = scmp.ne.s32.totalorder %s62, %s63
      %p75 = scmp.eq.s32.totalorder %s20, 1
      %p76 = por %p74, %p75
      %p78 = scmp.ne.s32.totalorder %s63, %s77
      %p79 = scmp.eq.s32.totalorder %s20, 0
      %p80 = por %p78, %p79
      %s82 = sadd.s32 %s81, 1
      %p85 = scmp.eq.s32.totalorder %s14, 1
      %p86 = scmp.ne.s32.totalorder %s81, %s83
      %p87 = scmp.eq.s32.totalorder %s14, 0
      %p88 = por %p86, %p87
      %p89 = scmp.ne.s32.totalorder %s81, %s83
      %p90 = scmp.eq.s32.totalorder %s19, 1
      %p91 = por %p89, %p90
      %p92 = scmp.ne.s32.totalorder %s83, %s84
      %p93 = scmp.eq.s32.totalorder %s19, 0
      %p94 = por %p92, %p93
      %p95 = scmp.ne.s32.totalorder %s83, %s84
      %p96 = scmp.eq.s32.totalorder %s20, 1
      %p97 = por %p95, %p96
      %p99 = scmp.ne.s32.totalorder %s84, %s98
      %p100 = scmp.eq.s32.totalorder %s20, 0
      %p101 = por %p99, %p100
      %s102 = ssub.s32 %s22, %s29
      %p103 = scmp.eq.s32.totalorder %s102, 0
      %s105 = sadd.s32 %s104, 1
      %s106 = scalar_select %p103, %s104, %s105
      %p109 = pneg %p103
      %p110 = scmp.eq.s32.totalorder %s14, 1
      %p111 = por %p109, %p110
      %p112 = scmp.ne.s32.totalorder %s104, %s107
      %p113 = scmp.eq.s32.totalorder %s14, 0
      %p114 = por %p112, %p113
      %p115 = scmp.ne.s32.totalorder %s104, %s107
      %p116 = scmp.eq.s32.totalorder %s19, 1
      %p117 = por %p115, %p116
      %p118 = scmp.ne.s32.totalorder %s107, %s108
      %p119 = scmp.eq.s32.totalorder %s19, 0
      %p120 = por %p118, %p119
      %p121 = scmp.ne.s32.totalorder %s107, %s108
      %p122 = scmp.eq.s32.totalorder %s20, 1
      %p123 = por %p121, %p122
      %p125 = scmp.ne.s32.totalorder %s108, %s124
      %p126 = scmp.eq.s32.totalorder %s20, 0
      %p127 = por %p125, %p126
      %s128 = ssub.s32 %s22, %s29
      %p129 = scmp.eq.s32.totalorder %s128, 0
      %s131 = sadd.s32 %s130, 1
      %s132 = scalar_select %p129, %s130, %s131
      %p135 = pneg %p129
      %p136 = scmp.eq.s32.totalorder %s14, 1
      %p137 = por %p135, %p136
      %p138 = scmp.ne.s32.totalorder %s130, %s133
      %p139 = scmp.eq.s32.totalorder %s14, 0
      %p140 = por %p138, %p139
      %p141 = scmp.ne.s32.totalorder %s130, %s133
      %p142 = scmp.eq.s32.totalorder %s19, 1
      %p143 = por %p141, %p142
      %p144 = scmp.ne.s32.totalorder %s133, %s134
      %p145 = scmp.eq.s32.totalorder %s19, 0
      %p146 = por %p144, %p145
      %p147 = scmp.ne.s32.totalorder %s133, %s134
      %p148 = scmp.eq.s32.totalorder %s20, 1
      %p149 = por %p147, %p148
      %p151 = scmp.ne.s32.totalorder %s134, %s150
      %p152 = scmp.eq.s32.totalorder %s20, 0
      %p153 = por %p151, %p152
      %s154 = ssub.s32 %s21, %s33
      %s155 = ssub.s32 %s22, %s29
      %s156 = sor.u32 %s154, %s155
      %p157 = scmp.eq.s32.totalorder %s156, 0
      %s159 = sadd.s32 %s158, 1
      %s160 = scalar_select %p157, %s158, %s159
      %p163 = pneg %p157
      %p164 = scmp.eq.s32.totalorder %s14, 1
      %p165 = por %p163, %p164
      %p166 = scmp.ne.s32.totalorder %s158, %s161
      %p167 = scmp.eq.s32.totalorder %s14, 0
      %p168 = por %p166, %p167
      %p169 = scmp.ne.s32.totalorder %s158, %s161
      %p170 = scmp.eq.s32.totalorder %s19, 1
      %p171 = por %p169, %p170
      %p172 = scmp.ne.s32.totalorder %s161, %s162
      %p173 = scmp.eq.s32.totalorder %s19, 0
      %p174 = por %p172, %p173
      %p175 = scmp.ne.s32.totalorder %s161, %s162
      %p176 = scmp.eq.s32.totalorder %s20, 1
      %p177 = por %p175, %p176
      %p179 = scmp.ne.s32.totalorder %s162, %s178
      %p180 = scmp.eq.s32.totalorder %s20, 0
      %p181 = por %p179, %p180
      %p182 = scmp.le.s32.totalorder 1, %s14
      %p183 = scmp.lt.s32.totalorder %s14, 3
      %p184 = pnand %p182, %p183
      %p185 = pneg %p184
      // Predicated region
      $region9: #{tpu_custom_call.1} parent=5 // pred_check
        _
      $region10: #{tpu_custom_call.1} parent=5 // pred_check_branch
        %187 = sbr.rel (%p184) target = $region12
      $region11: #{tpu_custom_call.1} parent=5 // pred_region
        %s188 = ssub.s32 %s14, 1
        // Predicated region
        $region13: #{tpu_custom_call.1} parent=11 // pred_check
          %p189 = pneg %p73
        $region14: #{tpu_custom_call.1} parent=11 // pred_check_branch
          %191 = sbr.rel (%p189) target = $region16
        $region15: #{tpu_custom_call.1} parent=11 // pred_region
          _
        $region16: #{tpu_custom_call.1} parent=11 // pred_fallthru
          _
        // Predicated region
        $region17: #{tpu_custom_call.1} parent=11 // pred_check
          %p192 = pneg %p94
        $region18: #{tpu_custom_call.1} parent=11 // pred_check_branch
          %194 = sbr.rel (%p192) target = $region20
        $region19: #{tpu_custom_call.1} parent=11 // pred_region
          _
        $region20: #{tpu_custom_call.1} parent=11 // pred_fallthru
          _
        // Predicated region
        $region21: #{tpu_custom_call.1} parent=11 // pred_check
          %p195 = pneg %p120
        $region22: #{tpu_custom_call.1} parent=11 // pred_check_branch
          %197 = sbr.rel (%p195) target = $region24
        $region23: #{tpu_custom_call.1} parent=11 // pred_region
          %s198 = smul.u32 7, %s24
          %p199 = scmp.lt.s32.totalorder %s198, 6
          %s200 = scalar_select %p199, %s198, 6
          %s201 = smul.addr %s200, 4
          %s202 = scalar_lea.vmem %s3, %s201
          %s203 = smul.u32 7, %s24
        $region24: #{tpu_custom_call.1} parent=11 // pred_fallthru
          _
        // Predicated region
        $region25: #{tpu_custom_call.1} parent=11 // pred_check
          %p204 = pneg %p146
        $region26: #{tpu_custom_call.1} parent=11 // pred_check_branch
          %206 = sbr.rel (%p204) target = $region28
        $region27: #{tpu_custom_call.1} parent=11 // pred_region
          %s207 = smul.u32 7, %s24
          %p208 = scmp.lt.s32.totalorder %s207, 6
          %s209 = scalar_select %p208, %s207, 6
          %s210 = scalar_lea.vmem %s4, %s209
          %s211 = smul.u32 7, %s24
        $region28: #{tpu_custom_call.1} parent=11 // pred_fallthru
          _
      $region12: #{tpu_custom_call.1} parent=5 // pred_fallthru
        _
      %p212 = scmp.lt.s32.totalorder %s14, 2
      // Predicated region
      $region29: #{tpu_custom_call.1} parent=5 // pred_check
        %p213 = pneg %p212
      $region30: #{tpu_custom_call.1} parent=5 // pred_check_branch
        %215 = sbr.rel (%p213) target = $region32
      $region31: #{tpu_custom_call.1} parent=5 // pred_region
        // Predicated region
        $region33: #{tpu_custom_call.1} parent=31 // pred_check
          %p216 = pneg %p46
        $region34: #{tpu_custom_call.1} parent=31 // pred_check_branch
          %218 = sbr.rel (%p216) target = $region36
        $region35: #{tpu_custom_call.1} parent=31 // pred_region
          %s219 = smul.u32 2, %s21
          %p220 = scmp.lt.s32.totalorder %s219, 3
          %s221 = scalar_select %p220, %s219, 3
          %s222 = smul.addr %s221, 8
          %s223 = scalar_lea.vmem %s0, %s222
          %s224 = smul.u32 2, %s21
        $region36: #{tpu_custom_call.1} parent=31 // pred_fallthru
          _
      $region32: #{tpu_custom_call.1} parent=5 // pred_fallthru
        _
      %p225 = scmp.le.s32.totalorder 1, %s14
      %p226 = scmp.lt.s32.totalorder %s14, 3
      %p227 = pnand %p225, %p226
      %p228 = pneg %p227
      // Predicated region
      $region37: #{tpu_custom_call.1} parent=5 // pred_check
        _
      $region38: #{tpu_custom_call.1} parent=5 // pred_check_branch
        %230 = sbr.rel (%p227) target = $region40
      $region39: #{tpu_custom_call.1} parent=5 // pred_region
        %s231 = ssub.s32 %s14, 1
        %s232 = smul.u32 2, %s23
        %p233 = scmp.lt.s32.totalorder %s232, 3
        %s234 = scalar_select %p233, %s232, 3
        %s235 = smul.addr %s234, 8
        %s236 = scalar_lea.vmem %s0, %s235
        %p237 = pneg %p52
        %p238 = pneg %p49
        %p239 = pneg %p73
        %p240 = pneg %p70
        %p241 = pneg %p94
        %p242 = pneg %p91
        %s243 = smul.u32 7, %s24
        %p244 = scmp.lt.s32.totalorder %s243, 6
        %s245 = scalar_select %p244, %s243, 6
        %s246 = smul.addr %s245, 4
        %s247 = scalar_lea.vmem %s3, %s246
        %p248 = pneg %p120
        %p249 = pneg %p117
        %s250 = smul.u32 7, %s24
        %p251 = scmp.lt.s32.totalorder %s250, 6
        %s252 = scalar_select %p251, %s250, 6
        %s253 = scalar_lea.vmem %s4, %s252
        %p254 = pneg %p146
        %p255 = pneg %p143
        %p256 = pneg %p174
        %p257 = pneg %p171
        %s258 = sand.u32 %s161, 1
        %s259 = scalar_lea.sflag [#allocation4], %s258
        %s260 = sand.u32 %s161, 1
        %s261 = smul.addr %s260, 112
        %s262 = scalar_lea.vmem [#allocation3], %s261
        %s263 = smul.u32 2, %s23
        %p264 = scmp.lt.s32.totalorder %s263, 3
        %s265 = scalar_select %p264, %s263, 3
        %s266 = smul.addr %s265, 8
        %s267 = scalar_lea.vmem %s0, %s266
        %s268 = smul.u32 2, %s23
        %s269 = smul.u32 7, %s24
        %p270 = scmp.lt.s32.totalorder %s269, 6
        %s271 = scalar_select %p270, %s269, 6
        %s272 = smul.addr %s271, 4
        %s273 = scalar_lea.vmem %s3, %s272
        %s274 = smul.u32 7, %s24
        %s275 = smul.u32 7, %s24
        %p276 = scmp.lt.s32.totalorder %s275, 6
        %s277 = scalar_select %p276, %s275, 6
        %s278 = scalar_lea.vmem %s4, %s277
        %s279 = smul.u32 7, %s24
        %s280 = smul.u32 2, %s23
        %s281 = smul.u32 7, %s24
        %p283 = scmp.eq.s32.totalorder %s24, 0
        // Predicated region
        $region41: #{tpu_custom_call.1} parent=39 // pred_check
          %p284 = pneg %p283
        $region42: #{tpu_custom_call.1} parent=39 // pred_check_branch
          %286 = sbr.rel (%p284) target = $region44
        $region43: #{tpu_custom_call.1} parent=39 // pred_region
          %v287 = vld [vmem:[%s267] sm:$0xff]
          %v288 = vld [vmem:[%s267 + $0x8] sm:$0xff]
          %v289 = vpack.c.bf16 %v288, %v287
          %v290 = vld [vmem:[%s1] sm:$0xff]
          %v291 = vld [vmem:[%s1 + $0x8] sm:$0xff]
          %v292 = vld [vmem:[%s1 + $0x10] sm:$0xff]
          %v293 = vld [vmem:[%s1 + $0x18] sm:$0xff]
          %v294 = vld [vmem:[%s1 + $0x20] sm:$0xff]
          %v295 = vld [vmem:[%s1 + $0x28] sm:$0xff]
          %v296 = vld [vmem:[%s1 + $0x30] sm:$0xff]
          %v297 = vld [vmem:[%s1 + $0x38] sm:$0xff]
          %v298 = vld [vmem:[%s2] sm:$0x3]
          %v300 = vlaneseq
          %v301 = vshrl.u32 %v300, 7
          %v302 = vsub.s32 0, %v301
          %v303 = vrot.slane %v298, %v302
          %v304 = vlaneseq
          %v305 = vshrl.u32 %v304, 7
          %v306 = vsub.s32 1, %v305
          %v307 = vrot.slane %v298, %v306
          %v318 = vunpack.c.l.b16 %v290
          %v319 = vunpack.c.h.b16 %v290
          %v320 = vunpack.c.l.b16 %v291
          %v321 = vunpack.c.h.b16 %v291
          %v322 = vunpack.c.l.b16 %v292
          %v323 = vunpack.c.h.b16 %v292
          %v324 = vunpack.c.l.b16 %v293
          %v325 = vunpack.c.h.b16 %v293
          %v326 = vunpack.c.l.b16 %v294
          %v327 = vunpack.c.h.b16 %v294
          %v328 = vunpack.c.l.b16 %v295
          %v329 = vunpack.c.h.b16 %v295
          %v330 = vunpack.c.l.b16 %v296
          %v331 = vunpack.c.h.b16 %v296
          %v332 = vunpack.c.l.b16 %v297
          %v333 = vunpack.c.h.b16 %v297
          %v334 = vpack.c.b16 %v320, %v318
          %v335 = vpack.c.b16 %v321, %v319
          %v336 = vpack.c.b16 %v324, %v322
          %v337 = vpack.c.b16 %v325, %v323
          %v338 = vpack.c.b16 %v328, %v326
          %v339 = vpack.c.b16 %v329, %v327
          %v340 = vpack.c.b16 %v332, %v330
          %v341 = vpack.c.b16 %v333, %v331
          %vm350 = vcmask 523264
          %v352 = vsel %vm350, %v289, 0
          %354 = vmatprep.subr.bf16.mxu0 %v335
          %355 = vmatpush1.bf16.msra.mxu0 %v334
          %356 = vmatprep.subr.bf16.mxu0 %v337
          %357 = vmatpush1.bf16.msra.mxu0 %v336
          %358 = vmatprep.subr.bf16.mxu0 %v339
          %359 = vmatpush1.bf16.msra.mxu0 %v338
          %360 = vmatprep.subr.bf16.mxu0 %v341
          %361 = vmatpush1.bf16.msra.mxu0 %v340
          %362 = vmatprep.subr.bf16.mxu0 0
          %363 = vmatpush1.bf16.msra.mxu0 0
          %364 = vmatprep.subr.bf16.mxu0 0
          %365 = vmatpush1.bf16.msra.mxu0 0
          %366 = vmatprep.subr.bf16.mxu0 0
          %367 = vmatpush1.bf16.msra.mxu0 0
          %368 = vmatprep.subr.bf16.mxu0 0
          %369 = vmatpush1.bf16.msra.mxu0 0
          %370 = vmatprep.subr.bf16.mxu0 0
          %371 = vmatpush1.bf16.msra.mxu0 0
          %372 = vmatprep.subr.bf16.mxu0 0
          %373 = vmatpush1.bf16.msra.mxu0 0
          %374 = vmatprep.subr.bf16.mxu0 0
          %375 = vmatpush1.bf16.msra.mxu0 0
          %376 = vmatprep.subr.bf16.mxu0 0
          %377 = vmatpush1.bf16.msra.mxu0 0
          %378 = vmatprep.subr.bf16.mxu0 0
          %379 = vmatpush1.bf16.msra.mxu0 0
          %380 = vmatprep.subr.bf16.mxu0 0
          %381 = vmatpush1.bf16.msra.mxu0 0
          %382 = vmatprep.subr.bf16.mxu0 0
          %383 = vmatpush1.bf16.msra.mxu0 0
          %384 = vmatprep.subr.bf16.mxu0 0
          %385 = vmatpush1.bf16.msra.mxu0 0
          %386 = vmatprep.mubr.bf16.mxu0 0
          %387 = vmatmul.mubr.bf16.gmra.mrb[0].mxu0 %v352
          %v388 = vpop.f32.mrb[0].mxu0
          %v389 = vadd.f32 %v303, %v388
          %v390 = vpop.f32.mrb[0].mxu0
          %v391 = vadd.f32 %v307, %v390
          %v392 = vpop.f32.mrb[0].mxu0
          %v393 = vadd.f32 %v303, %v392
          %v394 = vpop.f32.mrb[0].mxu0
          %v395 = vadd.f32 %v307, %v394
          %396 = vdwg.mxu0
          %v397 = vmax.f32 %v389, 0.0
          %v398 = vmax.f32 %v391, 0.0
          %v399 = vmax.f32 %v393, 0.0
          %v400 = vmax.f32 %v395, 0.0
          %401 = vst [vmem:[#allocation2] sm:$0xff] %v397
          %402 = vst [vmem:[#allocation2 + $0x8] sm:$0xff] %v398
          %403 = vst [vmem:[#allocation2 + $0x10] sm:$0xff] %v399
          %404 = vst [vmem:[#allocation2 + $0x18] sm:$0xff] %v400
        $region44: #{tpu_custom_call.1} parent=39 // pred_fallthru
          _
        %v405 = vld [vmem:[#allocation2] sm:$0xff]
        %v406 = vld [vmem:[#allocation2 + $0x8] sm:$0xff]
        %v407 = vld [vmem:[#allocation2 + $0x10] sm:$0xff]
        %v408 = vld [vmem:[#allocation2 + $0x18] sm:$0xff]
        %v409 = vpack.c.bf16 %v407, %v405
        %v410 = vpack.c.bf16 %v408, %v406
        %v411 = vld [vmem:[%s273] sm:$0xff]
        %v412 = vld [vmem:[%s273 + $0x8] sm:$0xff]
        %v413 = vld [vmem:[%s273 + $0x10] sm:$0xff]
        %v414 = vld [vmem:[%s273 + $0x18] sm:$0xf]
        %v415 = vld [vmem:[%s273 + $0x1c] sm:$0xff]
        %v416 = vld [vmem:[%s273 + $0x24] sm:$0xff]
        %v417 = vld [vmem:[%s273 + $0x2c] sm:$0xff]
        %v418 = vld [vmem:[%s273 + $0x34] sm:$0xf]
        %v419 = vld [vmem:[%s273 + $0x38] sm:$0xff]
        %v420 = vld [vmem:[%s273 + $0x40] sm:$0xff]
        %v421 = vld [vmem:[%s273 + $0x48] sm:$0xff]
        %v422 = vld [vmem:[%s273 + $0x50] sm:$0xf]
        %v423 = vld [vmem:[%s273 + $0x54] sm:$0xff]
        %v424 = vld [vmem:[%s273 + $0x5c] sm:$0xff]
        %v425 = vld [vmem:[%s273 + $0x64] sm:$0xff]
        %v426 = vld [vmem:[%s273 + $0x6c] sm:$0xf]
        %v427 = vld [vmem:[%s273 + $0x70] sm:$0xff]
        %v428 = vld [vmem:[%s273 + $0x78] sm:$0xff]
        %v429 = vld [vmem:[%s273 + $0x80] sm:$0xff]
        %v430 = vld [vmem:[%s273 + $0x88] sm:$0xf]
        %v431 = vld [vmem:[%s273 + $0x8c] sm:$0xff]
        %v432 = vld [vmem:[%s273 + $0x94] sm:$0xff]
        %v433 = vld [vmem:[%s273 + $0x9c] sm:$0xff]
        %v434 = vld [vmem:[%s273 + $0xa4] sm:$0xf]
        %v435 = vld [vmem:[%s273 + $0xa8] sm:$0xff]
        %v436 = vld [vmem:[%s273 + $0xb0] sm:$0xff]
        %v437 = vld [vmem:[%s273 + $0xb8] sm:$0xff]
        %v438 = vld [vmem:[%s273 + $0xc0] sm:$0xf]
        %v439 = vld [vmem:[%s273 + $0xc4] sm:$0xff]
        %v440 = vld [vmem:[%s273 + $0xcc] sm:$0xff]
        %v441 = vld [vmem:[%s273 + $0xd4] sm:$0xff]
        %v442 = vld [vmem:[%s273 + $0xdc] sm:$0xf]
        %v443 = vld [vmem:[%s273 + $0xe0] sm:$0xff]
        %v444 = vld [vmem:[%s273 + $0xe8] sm:$0xff]
        %v445 = vld [vmem:[%s273 + $0xf0] sm:$0xff]
        %v446 = vld [vmem:[%s273 + $0xf8] sm:$0xf]
        %v447 = vld [vmem:[%s273 + $0xfc] sm:$0xff]
        %v448 = vld [vmem:[%s273 + $0x104] sm:$0xff]
        %v449 = vld [vmem:[%s273 + $0x10c] sm:$0xff]
        %v450 = vld [vmem:[%s273 + $0x114] sm:$0xf]
        %v451 = vld [vmem:[%s273 + $0x118] sm:$0xff]
        %v452 = vld [vmem:[%s273 + $0x120] sm:$0xff]
        %v453 = vld [vmem:[%s273 + $0x128] sm:$0xff]
        %v454 = vld [vmem:[%s273 + $0x130] sm:$0xf]
        %v455 = vld [vmem:[%s273 + $0x134] sm:$0xff]
        %v456 = vld [vmem:[%s273 + $0x13c] sm:$0xff]
        %v457 = vld [vmem:[%s273 + $0x144] sm:$0xff]
        %v458 = vld [vmem:[%s273 + $0x14c] sm:$0xf]
        %v459 = vld [vmem:[%s273 + $0x150] sm:$0xff]
        %v460 = vld [vmem:[%s273 + $0x158] sm:$0xff]
        %v461 = vld [vmem:[%s273 + $0x160] sm:$0xff]
        %v462 = vld [vmem:[%s273 + $0x168] sm:$0xf]
        %v463 = vld [vmem:[%s273 + $0x16c] sm:$0xff]
        %v464 = vld [vmem:[%s273 + $0x174] sm:$0xff]
        %v465 = vld [vmem:[%s273 + $0x17c] sm:$0xff]
        %v466 = vld [vmem:[%s273 + $0x184] sm:$0xf]
        %v467 = vld [vmem:[%s273 + $0x188] sm:$0xff]
        %v468 = vld [vmem:[%s273 + $0x190] sm:$0xff]
        %v469 = vld [vmem:[%s273 + $0x198] sm:$0xff]
        %v470 = vld [vmem:[%s273 + $0x1a0] sm:$0xf]
        %v471 = vld [vmem:[%s273 + $0x1a4] sm:$0xff]
        %v472 = vld [vmem:[%s273 + $0x1ac] sm:$0xff]
        %v473 = vld [vmem:[%s273 + $0x1b4] sm:$0xff]
        %v474 = vld [vmem:[%s273 + $0x1bc] sm:$0xf]
        %v475 = vld [vmem:[%s273 + $0x1c0] sm:$0xff]
        %v476 = vld [vmem:[%s273 + $0x1c8] sm:$0xff]
        %v477 = vld [vmem:[%s273 + $0x1d0] sm:$0xff]
        %v478 = vld [vmem:[%s273 + $0x1d8] sm:$0xf]
        %v479 = vld [vmem:[%s273 + $0x1dc] sm:$0xff]
        %v480 = vld [vmem:[%s273 + $0x1e4] sm:$0xff]
        %v481 = vld [vmem:[%s273 + $0x1ec] sm:$0xff]
        %v482 = vld [vmem:[%s273 + $0x1f4] sm:$0xf]
        %v483 = vld [vmem:[%s273 + $0x1f8] sm:$0xff]
        %v484 = vld [vmem:[%s273 + $0x200] sm:$0xff]
        %v485 = vld [vmem:[%s273 + $0x208] sm:$0xff]
        %v486 = vld [vmem:[%s273 + $0x210] sm:$0xf]
        %v487 = vld [vmem:[%s273 + $0x214] sm:$0xff]
        %v488 = vld [vmem:[%s273 + $0x21c] sm:$0xff]
        %v489 = vld [vmem:[%s273 + $0x224] sm:$0xff]
        %v490 = vld [vmem:[%s273 + $0x22c] sm:$0xf]
        %v491 = vld [vmem:[%s273 + $0x230] sm:$0xff]
        %v492 = vld [vmem:[%s273 + $0x238] sm:$0xff]
        %v493 = vld [vmem:[%s273 + $0x240] sm:$0xff]
        %v494 = vld [vmem:[%s273 + $0x248] sm:$0xf]
        %v495 = vld [vmem:[%s273 + $0x24c] sm:$0xff]
        %v496 = vld [vmem:[%s273 + $0x254] sm:$0xff]
        %v497 = vld [vmem:[%s273 + $0x25c] sm:$0xff]
        %v498 = vld [vmem:[%s273 + $0x264] sm:$0xf]
        %v499 = vld [vmem:[%s273 + $0x268] sm:$0xff]
        %v500 = vld [vmem:[%s273 + $0x270] sm:$0xff]
        %v501 = vld [vmem:[%s273 + $0x278] sm:$0xff]
        %v502 = vld [vmem:[%s273 + $0x280] sm:$0xf]
        %v503 = vld [vmem:[%s273 + $0x284] sm:$0xff]
        %v504 = vld [vmem:[%s273 + $0x28c] sm:$0xff]
        %v505 = vld [vmem:[%s273 + $0x294] sm:$0xff]
        %v506 = vld [vmem:[%s273 + $0x29c] sm:$0xf]
        %v507 = vld [vmem:[%s273 + $0x2a0] sm:$0xff]
        %v508 = vld [vmem:[%s273 + $0x2a8] sm:$0xff]
        %v509 = vld [vmem:[%s273 + $0x2b0] sm:$0xff]
        %v510 = vld [vmem:[%s273 + $0x2b8] sm:$0xf]
        %v511 = vld [vmem:[%s273 + $0x2bc] sm:$0xff]
        %v512 = vld [vmem:[%s273 + $0x2c4] sm:$0xff]
        %v513 = vld [vmem:[%s273 + $0x2cc] sm:$0xff]
        %v514 = vld [vmem:[%s273 + $0x2d4] sm:$0xf]
        %v515 = vld [vmem:[%s273 + $0x2d8] sm:$0xff]
        %v516 = vld [vmem:[%s273 + $0x2e0] sm:$0xff]
        %v517 = vld [vmem:[%s273 + $0x2e8] sm:$0xff]
        %v518 = vld [vmem:[%s273 + $0x2f0] sm:$0xf]
        %v519 = vld [vmem:[%s273 + $0x2f4] sm:$0xff]
        %v520 = vld [vmem:[%s273 + $0x2fc] sm:$0xff]
        %v521 = vld [vmem:[%s273 + $0x304] sm:$0xff]
        %v522 = vld [vmem:[%s273 + $0x30c] sm:$0xf]
        %v523 = vld [vmem:[%s273 + $0x310] sm:$0xff]
        %v524 = vld [vmem:[%s273 + $0x318] sm:$0xff]
        %v525 = vld [vmem:[%s273 + $0x320] sm:$0xff]
        %v526 = vld [vmem:[%s273 + $0x328] sm:$0xf]
        %v527 = vld [vmem:[%s273 + $0x32c] sm:$0xff]
        %v528 = vld [vmem:[%s273 + $0x334] sm:$0xff]
        %v529 = vld [vmem:[%s273 + $0x33c] sm:$0xff]
        %v530 = vld [vmem:[%s273 + $0x344] sm:$0xf]
        %v531 = vld [vmem:[%s273 + $0x348] sm:$0xff]
        %v532 = vld [vmem:[%s273 + $0x350] sm:$0xff]
        %v533 = vld [vmem:[%s273 + $0x358] sm:$0xff]
        %v534 = vld [vmem:[%s273 + $0x360] sm:$0xf]
        %v535 = vld [vmem:[%s273 + $0x364] sm:$0xff]
        %v536 = vld [vmem:[%s273 + $0x36c] sm:$0xff]
        %v537 = vld [vmem:[%s273 + $0x374] sm:$0xff]
        %v538 = vld [vmem:[%s273 + $0x37c] sm:$0xf]
        %v539 = vld [vmem:[%s278] sm:$0x7f]
        %v541 = vlaneseq
        %v542 = vshrl.u32 %v541, 7
        %v543 = vsub.s32 0, %v542
        %v544 = vrot.slane %v539, %v543
        %v545 = vlaneseq
        %v546 = vshrl.u32 %v545, 7
        %v547 = vsub.s32 1, %v546
        %v548 = vrot.slane %v539, %v547
        %v549 = vlaneseq
        %v550 = vshrl.u32 %v549, 7
        %v551 = vsub.s32 2, %v550
        %v552 = vrot.slane %v539, %v551
        %v553 = vlaneseq
        %v554 = vshrl.u32 %v553, 7
        %v555 = vsub.s32 3, %v554
        %v556 = vrot.slane %v539, %v555
        %v557 = vlaneseq
        %v558 = vshrl.u32 %v557, 7
        %v559 = vsub.s32 4, %v558
        %v560 = vrot.slane %v539, %v559
        %v561 = vlaneseq
        %v562 = vshrl.u32 %v561, 7
        %v563 = vsub.s32 5, %v562
        %v564 = vrot.slane %v539, %v563
        %v565 = vlaneseq
        %v566 = vshrl.u32 %v565, 7
        %v567 = vsub.s32 6, %v566
        %v568 = vrot.slane %v539, %v567
        %v704 = vunpack.c.l.b16 %v411
        %v705 = vunpack.c.h.b16 %v411
        %v706 = vunpack.c.l.b16 %v412
        %v707 = vunpack.c.h.b16 %v412
        %v708 = vunpack.c.l.b16 %v413
        %v709 = vunpack.c.h.b16 %v413
        %v710 = vunpack.c.l.b16 %v414
        %v711 = vunpack.c.l.b16 %v415
        %v712 = vunpack.c.h.b16 %v415
        %v713 = vunpack.c.l.b16 %v416
        %v714 = vunpack.c.h.b16 %v416
        %v715 = vunpack.c.l.b16 %v417
        %v716 = vunpack.c.h.b16 %v417
        %v717 = vunpack.c.l.b16 %v418
        %v718 = vunpack.c.l.b16 %v419
        %v719 = vunpack.c.h.b16 %v419
        %v720 = vunpack.c.l.b16 %v420
        %v721 = vunpack.c.h.b16 %v420
        %v722 = vunpack.c.l.b16 %v421
        %v723 = vunpack.c.h.b16 %v421
        %v724 = vunpack.c.l.b16 %v422
        %v725 = vunpack.c.l.b16 %v423
        %v726 = vunpack.c.h.b16 %v423
        %v727 = vunpack.c.l.b16 %v424
        %v728 = vunpack.c.h.b16 %v424
        %v729 = vunpack.c.l.b16 %v425
        %v730 = vunpack.c.h.b16 %v425
        %v731 = vunpack.c.l.b16 %v426
        %v732 = vunpack.c.l.b16 %v427
        %v733 = vunpack.c.h.b16 %v427
        %v734 = vunpack.c.l.b16 %v428
        %v735 = vunpack.c.h.b16 %v428
        %v736 = vunpack.c.l.b16 %v429
        %v737 = vunpack.c.h.b16 %v429
        %v738 = vunpack.c.l.b16 %v430
        %v739 = vunpack.c.l.b16 %v431
        %v740 = vunpack.c.h.b16 %v431
        %v741 = vunpack.c.l.b16 %v432
        %v742 = vunpack.c.h.b16 %v432
        %v743 = vunpack.c.l.b16 %v433
        %v744 = vunpack.c.h.b16 %v433
        %v745 = vunpack.c.l.b16 %v434
        %v746 = vunpack.c.l.b16 %v435
        %v747 = vunpack.c.h.b16 %v435
        %v748 = vunpack.c.l.b16 %v436
        %v749 = vunpack.c.h.b16 %v436
        %v750 = vunpack.c.l.b16 %v437
        %v751 = vunpack.c.h.b16 %v437
        %v752 = vunpack.c.l.b16 %v438
        %v753 = vunpack.c.l.b16 %v439
        %v754 = vunpack.c.h.b16 %v439
        %v755 = vunpack.c.l.b16 %v440
        %v756 = vunpack.c.h.b16 %v440
        %v757 = vunpack.c.l.b16 %v441
        %v758 = vunpack.c.h.b16 %v441
        %v759 = vunpack.c.l.b16 %v442
        %v760 = vunpack.c.l.b16 %v443
        %v761 = vunpack.c.h.b16 %v443
        %v762 = vunpack.c.l.b16 %v444
        %v763 = vunpack.c.h.b16 %v444
        %v764 = vunpack.c.l.b16 %v445
        %v765 = vunpack.c.h.b16 %v445
        %v766 = vunpack.c.l.b16 %v446
        %v767 = vunpack.c.l.b16 %v447
        %v768 = vunpack.c.h.b16 %v447
        %v769 = vunpack.c.l.b16 %v448
        %v770 = vunpack.c.h.b16 %v448
        %v771 = vunpack.c.l.b16 %v449
        %v772 = vunpack.c.h.b16 %v449
        %v773 = vunpack.c.l.b16 %v450
        %v774 = vunpack.c.l.b16 %v451
        %v775 = vunpack.c.h.b16 %v451
        %v776 = vunpack.c.l.b16 %v452
        %v777 = vunpack.c.h.b16 %v452
        %v778 = vunpack.c.l.b16 %v453
        %v779 = vunpack.c.h.b16 %v453
        %v780 = vunpack.c.l.b16 %v454
        %v781 = vunpack.c.l.b16 %v455
        %v782 = vunpack.c.h.b16 %v455
        %v783 = vunpack.c.l.b16 %v456
        %v784 = vunpack.c.h.b16 %v456
        %v785 = vunpack.c.l.b16 %v457
        %v786 = vunpack.c.h.b16 %v457
        %v787 = vunpack.c.l.b16 %v458
        %v788 = vunpack.c.l.b16 %v459
        %v789 = vunpack.c.h.b16 %v459
        %v790 = vunpack.c.l.b16 %v460
        %v791 = vunpack.c.h.b16 %v460
        %v792 = vunpack.c.l.b16 %v461
        %v793 = vunpack.c.h.b16 %v461
        %v794 = vunpack.c.l.b16 %v462
        %v795 = vunpack.c.l.b16 %v463
        %v796 = vunpack.c.h.b16 %v463
        %v797 = vunpack.c.l.b16 %v464
        %v798 = vunpack.c.h.b16 %v464
        %v799 = vunpack.c.l.b16 %v465
        %v800 = vunpack.c.h.b16 %v465
        %v801 = vunpack.c.l.b16 %v466
        %v802 = vunpack.c.l.b16 %v467
        %v803 = vunpack.c.h.b16 %v467
        %v804 = vunpack.c.l.b16 %v468
        %v805 = vunpack.c.h.b16 %v468
        %v806 = vunpack.c.l.b16 %v469
        %v807 = vunpack.c.h.b16 %v469
        %v808 = vunpack.c.l.b16 %v470
        %v809 = vunpack.c.l.b16 %v471
        %v810 = vunpack.c.h.b16 %v471
        %v811 = vunpack.c.l.b16 %v472
        %v812 = vunpack.c.h.b16 %v472
        %v813 = vunpack.c.l.b16 %v473
        %v814 = vunpack.c.h.b16 %v473
        %v815 = vunpack.c.l.b16 %v474
        %v816 = vunpack.c.l.b16 %v475
        %v817 = vunpack.c.h.b16 %v475
        %v818 = vunpack.c.l.b16 %v476
        %v819 = vunpack.c.h.b16 %v476
        %v820 = vunpack.c.l.b16 %v477
        %v821 = vunpack.c.h.b16 %v477
        %v822 = vunpack.c.l.b16 %v478
        %v823 = vunpack.c.l.b16 %v479
        %v824 = vunpack.c.h.b16 %v479
        %v825 = vunpack.c.l.b16 %v480
        %v826 = vunpack.c.h.b16 %v480
        %v827 = vunpack.c.l.b16 %v481
        %v828 = vunpack.c.h.b16 %v481
        %v829 = vunpack.c.l.b16 %v482
        %v830 = vunpack.c.l.b16 %v483
        %v831 = vunpack.c.h.b16 %v483
        %v832 = vunpack.c.l.b16 %v484
        %v833 = vunpack.c.h.b16 %v484
        %v834 = vunpack.c.l.b16 %v485
        %v835 = vunpack.c.h.b16 %v485
        %v836 = vunpack.c.l.b16 %v486
        %v837 = vunpack.c.l.b16 %v487
        %v838 = vunpack.c.h.b16 %v487
        %v839 = vunpack.c.l.b16 %v488
        %v840 = vunpack.c.h.b16 %v488
        %v841 = vunpack.c.l.b16 %v489
        %v842 = vunpack.c.h.b16 %v489
        %v843 = vunpack.c.l.b16 %v490
        %v844 = vunpack.c.l.b16 %v491
        %v845 = vunpack.c.h.b16 %v491
        %v846 = vunpack.c.l.b16 %v492
        %v847 = vunpack.c.h.b16 %v492
        %v848 = vunpack.c.l.b16 %v493
        %v849 = vunpack.c.h.b16 %v493
        %v850 = vunpack.c.l.b16 %v494
        %v851 = vunpack.c.l.b16 %v495
        %v852 = vunpack.c.h.b16 %v495
        %v853 = vunpack.c.l.b16 %v496
        %v854 = vunpack.c.h.b16 %v496
        %v855 = vunpack.c.l.b16 %v497
        %v856 = vunpack.c.h.b16 %v497
        %v857 = vunpack.c.l.b16 %v498
        %v858 = vunpack.c.l.b16 %v499
        %v859 = vunpack.c.h.b16 %v499
        %v860 = vunpack.c.l.b16 %v500
        %v861 = vunpack.c.h.b16 %v500
        %v862 = vunpack.c.l.b16 %v501
        %v863 = vunpack.c.h.b16 %v501
        %v864 = vunpack.c.l.b16 %v502
        %v865 = vunpack.c.l.b16 %v503
        %v866 = vunpack.c.h.b16 %v503
        %v867 = vunpack.c.l.b16 %v504
        %v868 = vunpack.c.h.b16 %v504
        %v869 = vunpack.c.l.b16 %v505
        %v870 = vunpack.c.h.b16 %v505
        %v871 = vunpack.c.l.b16 %v506
        %v872 = vunpack.c.l.b16 %v507
        %v873 = vunpack.c.h.b16 %v507
        %v874 = vunpack.c.l.b16 %v508
        %v875 = vunpack.c.h.b16 %v508
        %v876 = vunpack.c.l.b16 %v509
        %v877 = vunpack.c.h.b16 %v509
        %v878 = vunpack.c.l.b16 %v510
        %v879 = vunpack.c.l.b16 %v511
        %v880 = vunpack.c.h.b16 %v511
        %v881 = vunpack.c.l.b16 %v512
        %v882 = vunpack.c.h.b16 %v512
        %v883 = vunpack.c.l.b16 %v513
        %v884 = vunpack.c.h.b16 %v513
        %v885 = vunpack.c.l.b16 %v514
        %v886 = vunpack.c.l.b16 %v515
        %v887 = vunpack.c.h.b16 %v515
        %v888 = vunpack.c.l.b16 %v516
        %v889 = vunpack.c.h.b16 %v516
        %v890 = vunpack.c.l.b16 %v517
        %v891 = vunpack.c.h.b16 %v517
        %v892 = vunpack.c.l.b16 %v518
        %v893 = vunpack.c.l.b16 %v519
        %v894 = vunpack.c.h.b16 %v519
        %v895 = vunpack.c.l.b16 %v520
        %v896 = vunpack.c.h.b16 %v520
        %v897 = vunpack.c.l.b16 %v521
        %v898 = vunpack.c.h.b16 %v521
        %v899 = vunpack.c.l.b16 %v522
        %v900 = vunpack.c.l.b16 %v523
        %v901 = vunpack.c.h.b16 %v523
        %v902 = vunpack.c.l.b16 %v524
        %v903 = vunpack.c.h.b16 %v524
        %v904 = vunpack.c.l.b16 %v525
        %v905 = vunpack.c.h.b16 %v525
        %v906 = vunpack.c.l.b16 %v526
        %v907 = vunpack.c.l.b16 %v527
        %v908 = vunpack.c.h.b16 %v527
        %v909 = vunpack.c.l.b16 %v528
        %v910 = vunpack.c.h.b16 %v528
        %v911 = vunpack.c.l.b16 %v529
        %v912 = vunpack.c.h.b16 %v529
        %v913 = vunpack.c.l.b16 %v530
        %v914 = vunpack.c.l.b16 %v531
        %v915 = vunpack.c.h.b16 %v531
        %v916 = vunpack.c.l.b16 %v532
        %v917 = vunpack.c.h.b16 %v532
        %v918 = vunpack.c.l.b16 %v533
        %v919 = vunpack.c.h.b16 %v533
        %v920 = vunpack.c.l.b16 %v534
        %v921 = vunpack.c.l.b16 %v535
        %v922 = vunpack.c.h.b16 %v535
        %v923 = vunpack.c.l.b16 %v536
        %v924 = vunpack.c.h.b16 %v536
        %v925 = vunpack.c.l.b16 %v537
        %v926 = vunpack.c.h.b16 %v537
        %v927 = vunpack.c.l.b16 %v538
        %v928 = vpack.c.b16 %v711, %v704
        %v929 = vpack.c.b16 %v712, %v705
        %v930 = vpack.c.b16 %v713, %v706
        %v931 = vpack.c.b16 %v714, %v707
        %v932 = vpack.c.b16 %v715, %v708
        %v933 = vpack.c.b16 %v716, %v709
        %v934 = vpack.c.b16 %v717, %v710
        %v935 = vpack.c.b16 %v725, %v718
        %v936 = vpack.c.b16 %v726, %v719
        %v937 = vpack.c.b16 %v727, %v720
        %v938 = vpack.c.b16 %v728, %v721
        %v939 = vpack.c.b16 %v729, %v722
        %v940 = vpack.c.b16 %v730, %v723
        %v941 = vpack.c.b16 %v731, %v724
        %v942 = vpack.c.b16 %v739, %v732
        %v943 = vpack.c.b16 %v740, %v733
        %v944 = vpack.c.b16 %v741, %v734
        %v945 = vpack.c.b16 %v742, %v735
        %v946 = vpack.c.b16 %v743, %v736
        %v947 = vpack.c.b16 %v744, %v737
        %v948 = vpack.c.b16 %v745, %v738
        %v949 = vpack.c.b16 %v753, %v746
        %v950 = vpack.c.b16 %v754, %v747
        %v951 = vpack.c.b16 %v755, %v748
        %v952 = vpack.c.b16 %v756, %v749
        %v953 = vpack.c.b16 %v757, %v750
        %v954 = vpack.c.b16 %v758, %v751
        %v955 = vpack.c.b16 %v759, %v752
        %v956 = vpack.c.b16 %v767, %v760
        %v957 = vpack.c.b16 %v768, %v761
        %v958 = vpack.c.b16 %v769, %v762
        %v959 = vpack.c.b16 %v770, %v763
        %v960 = vpack.c.b16 %v771, %v764
        %v961 = vpack.c.b16 %v772, %v765
        %v962 = vpack.c.b16 %v773, %v766
        %v963 = vpack.c.b16 %v781, %v774
        %v964 = vpack.c.b16 %v782, %v775
        %v965 = vpack.c.b16 %v783, %v776
        %v966 = vpack.c.b16 %v784, %v777
        %v967 = vpack.c.b16 %v785, %v778
        %v968 = vpack.c.b16 %v786, %v779
        %v969 = vpack.c.b16 %v787, %v780
        %v970 = vpack.c.b16 %v795, %v788
        %v971 = vpack.c.b16 %v796, %v789
        %v972 = vpack.c.b16 %v797, %v790
        %v973 = vpack.c.b16 %v798, %v791
        %v974 = vpack.c.b16 %v799, %v792
        %v975 = vpack.c.b16 %v800, %v793
        %v976 = vpack.c.b16 %v801, %v794
        %v977 = vpack.c.b16 %v809, %v802
        %v978 = vpack.c.b16 %v810, %v803
        %v979 = vpack.c.b16 %v811, %v804
        %v980 = vpack.c.b16 %v812, %v805
        %v981 = vpack.c.b16 %v813, %v806
        %v982 = vpack.c.b16 %v814, %v807
        %v983 = vpack.c.b16 %v815, %v808
        %v984 = vpack.c.b16 %v823, %v816
        %v985 = vpack.c.b16 %v824, %v817
        %v986 = vpack.c.b16 %v825, %v818
        %v987 = vpack.c.b16 %v826, %v819
        %v988 = vpack.c.b16 %v827, %v820
        %v989 = vpack.c.b16 %v828, %v821
        %v990 = vpack.c.b16 %v829, %v822
        %v991 = vpack.c.b16 %v837, %v830
        %v992 = vpack.c.b16 %v838, %v831
        %v993 = vpack.c.b16 %v839, %v832
        %v994 = vpack.c.b16 %v840, %v833
        %v995 = vpack.c.b16 %v841, %v834
        %v996 = vpack.c.b16 %v842, %v835
        %v997 = vpack.c.b16 %v843, %v836
        %v998 = vpack.c.b16 %v851, %v844
        %v999 = vpack.c.b16 %v852, %v845
        %v1000 = vpack.c.b16 %v853, %v846
        %v1001 = vpack.c.b16 %v854, %v847
        %v1002 = vpack.c.b16 %v855, %v848
        %v1003 = vpack.c.b16 %v856, %v849
        %v1004 = vpack.c.b16 %v857, %v850
        %v1005 = vpack.c.b16 %v865, %v858
        %v1006 = vpack.c.b16 %v866, %v859
        %v1007 = vpack.c.b16 %v867, %v860
        %v1008 = vpack.c.b16 %v868, %v861
        %v1009 = vpack.c.b16 %v869, %v862
        %v1010 = vpack.c.b16 %v870, %v863
        %v1011 = vpack.c.b16 %v871, %v864
        %v1012 = vpack.c.b16 %v879, %v872
        %v1013 = vpack.c.b16 %v880, %v873
        %v1014 = vpack.c.b16 %v881, %v874
        %v1015 = vpack.c.b16 %v882, %v875
        %v1016 = vpack.c.b16 %v883, %v876
        %v1017 = vpack.c.b16 %v884, %v877
        %v1018 = vpack.c.b16 %v885, %v878
        %v1019 = vpack.c.b16 %v893, %v886
        %v1020 = vpack.c.b16 %v894, %v887
        %v1021 = vpack.c.b16 %v895, %v888
        %v1022 = vpack.c.b16 %v896, %v889
        %v1023 = vpack.c.b16 %v897, %v890
        %v1024 = vpack.c.b16 %v898, %v891
        %v1025 = vpack.c.b16 %v899, %v892
        %v1026 = vpack.c.b16 %v907, %v900
        %v1027 = vpack.c.b16 %v908, %v901
        %v1028 = vpack.c.b16 %v909, %v902
        %v1029 = vpack.c.b16 %v910, %v903
        %v1030 = vpack.c.b16 %v911, %v904
        %v1031 = vpack.c.b16 %v912, %v905
        %v1032 = vpack.c.b16 %v913, %v906
        %v1033 = vpack.c.b16 %v921, %v914
        %v1034 = vpack.c.b16 %v922, %v915
        %v1035 = vpack.c.b16 %v923, %v916
        %v1036 = vpack.c.b16 %v924, %v917
        %v1037 = vpack.c.b16 %v925, %v918
        %v1038 = vpack.c.b16 %v926, %v919
        %v1039 = vpack.c.b16 %v927, %v920
        %1152 = vmatprep.subr.bf16.mxu0 %v929
        %1153 = vmatpush1.bf16.msra.mxu0 %v928
        %1154 = vmatprep.subr.bf16.mxu0 %v936
        %1155 = vmatpush1.bf16.msra.mxu0 %v935
        %1156 = vmatprep.subr.bf16.mxu0 %v943
        %1157 = vmatpush1.bf16.msra.mxu0 %v942
        %1158 = vmatprep.subr.bf16.mxu0 %v950
        %1159 = vmatpush1.bf16.msra.mxu0 %v949
        %1160 = vmatprep.subr.bf16.mxu0 %v957
        %1161 = vmatpush1.bf16.msra.mxu0 %v956
        %1162 = vmatprep.subr.bf16.mxu0 %v964
        %1163 = vmatpush1.bf16.msra.mxu0 %v963
        %1164 = vmatprep.subr.bf16.mxu0 %v971
        %1165 = vmatpush1.bf16.msra.mxu0 %v970
        %1166 = vmatprep.subr.bf16.mxu0 %v978
        %1167 = vmatpush1.bf16.msra.mxu0 %v977
        %1168 = vmatprep.subr.bf16.mxu0 %v985
        %1169 = vmatpush1.bf16.msra.mxu0 %v984
        %1170 = vmatprep.subr.bf16.mxu0 %v992
        %1171 = vmatpush1.bf16.msra.mxu0 %v991
        %1172 = vmatprep.subr.bf16.mxu0 %v999
        %1173 = vmatpush1.bf16.msra.mxu0 %v998
        %1174 = vmatprep.subr.bf16.mxu0 %v1006
        %1175 = vmatpush1.bf16.msra.mxu0 %v1005
        %1176 = vmatprep.subr.bf16.mxu0 %v1013
        %1177 = vmatpush1.bf16.msra.mxu0 %v1012
        %1178 = vmatprep.subr.bf16.mxu0 %v1020
        %1179 = vmatpush1.bf16.msra.mxu0 %v1019
        %1180 = vmatprep.subr.bf16.mxu0 %v1027
        %1181 = vmatpush1.bf16.msra.mxu0 %v1026
        %1182 = vmatprep.subr.bf16.mxu0 %v1034
        %1183 = vmatpush1.bf16.msra.mxu0 %v1033
        %1184 = vmatprep.mubr.bf16.mxu0 %v410
        %1185 = vmatmul.mubr.bf16.gmra.mrb[0].mxu0 %v409
        %v1186 = vpop.f32.mrb[0].mxu0
        %v1187 = vadd.f32 %v544, %v1186
        %v1188 = vpop.f32.mrb[0].mxu0
        %v1189 = vadd.f32 %v548, %v1188
        %v1190 = vpop.f32.mrb[0].mxu0
        %v1191 = vadd.f32 %v544, %v1190
        %v1192 = vpop.f32.mrb[0].mxu0
        %v1193 = vadd.f32 %v548, %v1192
        %1194 = vdwg.mxu0
        %1195 = vmatprep.subr.bf16.mxu0 %v931
        %1196 = vmatpush1.bf16.msra.mxu0 %v930
        %1197 = vmatprep.subr.bf16.mxu0 %v938
        %1198 = vmatpush1.bf16.msra.mxu0 %v937
        %1199 = vmatprep.subr.bf16.mxu0 %v945
        %1200 = vmatpush1.bf16.msra.mxu0 %v944
        %1201 = vmatprep.subr.bf16.mxu0 %v952
        %1202 = vmatpush1.bf16.msra.mxu0 %v951
        %1203 = vmatprep.subr.bf16.mxu0 %v959
        %1204 = vmatpush1.bf16.msra.mxu0 %v958
        %1205 = vmatprep.subr.bf16.mxu0 %v966
        %1206 = vmatpush1.bf16.msra.mxu0 %v965
        %1207 = vmatprep.subr.bf16.mxu0 %v973
        %1208 = vmatpush1.bf16.msra.mxu0 %v972
        %1209 = vmatprep.subr.bf16.mxu0 %v980
        %1210 = vmatpush1.bf16.msra.mxu0 %v979
        %1211 = vmatprep.subr.bf16.mxu0 %v987
        %1212 = vmatpush1.bf16.msra.mxu0 %v986
        %1213 = vmatprep.subr.bf16.mxu0 %v994
        %1214 = vmatpush1.bf16.msra.mxu0 %v993
        %1215 = vmatprep.subr.bf16.mxu0 %v1001
        %1216 = vmatpush1.bf16.msra.mxu0 %v1000
        %1217 = vmatprep.subr.bf16.mxu0 %v1008
        %1218 = vmatpush1.bf16.msra.mxu0 %v1007
        %1219 = vmatprep.subr.bf16.mxu0 %v1015
        %1220 = vmatpush1.bf16.msra.mxu0 %v1014
        %1221 = vmatprep.subr.bf16.mxu0 %v1022
        %1222 = vmatpush1.bf16.msra.mxu0 %v1021
        %1223 = vmatprep.subr.bf16.mxu0 %v1029
        %1224 = vmatpush1.bf16.msra.mxu0 %v1028
        %1225 = vmatprep.subr.bf16.mxu0 %v1036
        %1226 = vmatpush1.bf16.msra.mxu0 %v1035
        %1227 = vmatprep.mubr.bf16.mxu0 %v410
        %1228 = vmatmul.mubr.bf16.gmra.mrb[0].mxu0 %v409
        %v1229 = vpop.f32.mrb[0].mxu0
        %v1230 = vadd.f32 %v552, %v1229
        %v1231 = vpop.f32.mrb[0].mxu0
        %v1232 = vadd.f32 %v556, %v1231
        %v1233 = vpop.f32.mrb[0].mxu0
        %v1234 = vadd.f32 %v552, %v1233
        %v1235 = vpop.f32.mrb[0].mxu0
        %v1236 = vadd.f32 %v556, %v1235
        %1237 = vdwg.mxu0
        %1238 = vmatprep.subr.bf16.mxu0 %v933
        %1239 = vmatpush1.bf16.msra.mxu0 %v932
        %1240 = vmatprep.subr.bf16.mxu0 %v940
        %1241 = vmatpush1.bf16.msra.mxu0 %v939
        %1242 = vmatprep.subr.bf16.mxu0 %v947
        %1243 = vmatpush1.bf16.msra.mxu0 %v946
        %1244 = vmatprep.subr.bf16.mxu0 %v954
        %1245 = vmatpush1.bf16.msra.mxu0 %v953
        %1246 = vmatprep.subr.bf16.mxu0 %v961
        %1247 = vmatpush1.bf16.msra.mxu0 %v960
        %1248 = vmatprep.subr.bf16.mxu0 %v968
        %1249 = vmatpush1.bf16.msra.mxu0 %v967
        %1250 = vmatprep.subr.bf16.mxu0 %v975
        %1251 = vmatpush1.bf16.msra.mxu0 %v974
        %1252 = vmatprep.subr.bf16.mxu0 %v982
        %1253 = vmatpush1.bf16.msra.mxu0 %v981
        %1254 = vmatprep.subr.bf16.mxu0 %v989
        %1255 = vmatpush1.bf16.msra.mxu0 %v988
        %1256 = vmatprep.subr.bf16.mxu0 %v996
        %1257 = vmatpush1.bf16.msra.mxu0 %v995
        %1258 = vmatprep.subr.bf16.mxu0 %v1003
        %1259 = vmatpush1.bf16.msra.mxu0 %v1002
        %1260 = vmatprep.subr.bf16.mxu0 %v1010
        %1261 = vmatpush1.bf16.msra.mxu0 %v1009
        %1262 = vmatprep.subr.bf16.mxu0 %v1017
        %1263 = vmatpush1.bf16.msra.mxu0 %v1016
        %1264 = vmatprep.subr.bf16.mxu0 %v1024
        %1265 = vmatpush1.bf16.msra.mxu0 %v1023
        %1266 = vmatprep.subr.bf16.mxu0 %v1031
        %1267 = vmatpush1.bf16.msra.mxu0 %v1030
        %1268 = vmatprep.subr.bf16.mxu0 %v1038
        %1269 = vmatpush1.bf16.msra.mxu0 %v1037
        %1270 = vmatprep.mubr.bf16.mxu0 %v410
        %1271 = vmatmul.mubr.bf16.gmra.mrb[0].mxu0 %v409
        %v1272 = vpop.f32.mrb[0].mxu0
        %v1273 = vadd.f32 %v560, %v1272
        %v1274 = vpop.f32.mrb[0].mxu0
        %v1275 = vadd.f32 %v564, %v1274
        %v1276 = vpop.f32.mrb[0].mxu0
        %v1277 = vadd.f32 %v560, %v1276
        %v1278 = vpop.f32.mrb[0].mxu0
        %v1279 = vadd.f32 %v564, %v1278
        %1280 = vdwg.mxu0
        %1281 = vmatprep.subr.bf16.mxu0 0
        %1282 = vmatpush1.bf16.msra.mxu0 %v934
        %1283 = vmatprep.subr.bf16.mxu0 0
        %1284 = vmatpush1.bf16.msra.mxu0 %v941
        %1285 = vmatprep.subr.bf16.mxu0 0
        %1286 = vmatpush1.bf16.msra.mxu0 %v948
        %1287 = vmatprep.subr.bf16.mxu0 0
        %1288 = vmatpush1.bf16.msra.mxu0 %v955
        %1289 = vmatprep.subr.bf16.mxu0 0
        %1290 = vmatpush1.bf16.msra.mxu0 %v962
        %1291 = vmatprep.subr.bf16.mxu0 0
        %1292 = vmatpush1.bf16.msra.mxu0 %v969
        %1293 = vmatprep.subr.bf16.mxu0 0
        %1294 = vmatpush1.bf16.msra.mxu0 %v976
        %1295 = vmatprep.subr.bf16.mxu0 0
        %1296 = vmatpush1.bf16.msra.mxu0 %v983
        %1297 = vmatprep.subr.bf16.mxu0 0
        %1298 = vmatpush1.bf16.msra.mxu0 %v990
        %1299 = vmatprep.subr.bf16.mxu0 0
        %1300 = vmatpush1.bf16.msra.mxu0 %v997
        %1301 = vmatprep.subr.bf16.mxu0 0
        %1302 = vmatpush1.bf16.msra.mxu0 %v1004
        %1303 = vmatprep.subr.bf16.mxu0 0
        %1304 = vmatpush1.bf16.msra.mxu0 %v1011
        %1305 = vmatprep.subr.bf16.mxu0 0
        %1306 = vmatpush1.bf16.msra.mxu0 %v1018
        %1307 = vmatprep.subr.bf16.mxu0 0
        %1308 = vmatpush1.bf16.msra.mxu0 %v1025
        %1309 = vmatprep.subr.bf16.mxu0 0
        %1310 = vmatpush1.bf16.msra.mxu0 %v1032
        %1311 = vmatprep.subr.bf16.mxu0 0
        %1312 = vmatpush1.bf16.msra.mxu0 %v1039
        %1313 = vmatprep.mubr.bf16.mxu0 %v410
        %1314 = vmatmul.mubr.bf16.gmra.mrb[0].mxu0 %v409
        %v1315 = vpop.f32.mrb[0].mxu0
        %v1316 = vadd.f32 %v568, %v1315
        %v1317 = vpop.f32.mrb[0].mxu0
        %v1318 = vpop.f32.mrb[0].mxu0
        %v1319 = vadd.f32 %v568, %v1318
        %v1320 = vpop.f32.mrb[0].mxu0
        %1321 = vdwg.mxu0
        %v1322 = vtanh.pop %v1187
        %v1323 = vtanh.pop %v1189
        %v1324 = vtanh.pop %v1230
        %v1325 = vtanh.pop %v1232
        %v1326 = vtanh.pop %v1273
        %v1327 = vtanh.pop %v1275
        %v1328 = vtanh.pop %v1316
        %v1329 = vtanh.pop %v1191
        %v1330 = vtanh.pop %v1193
        %v1331 = vtanh.pop %v1234
        %v1332 = vtanh.pop %v1236
        %v1333 = vtanh.pop %v1277
        %v1334 = vtanh.pop %v1279
        %v1335 = vtanh.pop %v1319
        %1336 = vst [vmem:[%s262] sm:$0xff] %v1322
        %1337 = vst [vmem:[%s262 + $0x8] sm:$0xff] %v1323
        %1338 = vst [vmem:[%s262 + $0x10] sm:$0xff] %v1324
        %1339 = vst [vmem:[%s262 + $0x18] sm:$0xff] %v1325
        %1340 = vst [vmem:[%s262 + $0x20] sm:$0xff] %v1326
        %1341 = vst [vmem:[%s262 + $0x28] sm:$0xff] %v1327
        %vm1342 = vcmask 130048
        %1343 = vst.msk [vmem:[%s262 + $0x30] sm:$0xff] %vm1342, %v1328
        %1344 = vst [vmem:[%s262 + $0x38] sm:$0xff] %v1329
        %1345 = vst [vmem:[%s262 + $0x40] sm:$0xff] %v1330
        %1346 = vst [vmem:[%s262 + $0x48] sm:$0xff] %v1331
        %1347 = vst [vmem:[%s262 + $0x50] sm:$0xff] %v1332
        %1348 = vst [vmem:[%s262 + $0x58] sm:$0xff] %v1333
        %1349 = vst [vmem:[%s262 + $0x60] sm:$0xff] %v1334
        %1350 = vst.msk [vmem:[%s262 + $0x68] sm:$0xff] %vm1342, %v1335
        %s1351 = sand.u32 %s161, 1
        %s1352 = scalar_lea.sflag [#allocation4], %s1351
        %s1353 = sand.u32 %s161, 1
        %s1354 = smul.addr %s1353, 112
        %s1355 = scalar_lea.vmem [#allocation3], %s1354
        // Predicated region
        $region45: #{tpu_custom_call.1} parent=39 // pred_check
          %p1356 = pneg %p171
        $region46: #{tpu_custom_call.1} parent=39 // pred_check_branch
          %1358 = sbr.rel (%p1356) target = $region48
        $region47: #{tpu_custom_call.1} parent=39 // pred_region
          %s1359 = smul.u32 2, %s23
          %s1360 = smul.u32 7, %s24
          %s1362 = ssub.s32 1792, 1792
          %1363 = vsyncadd %s1352, %s1362
          %s1364 = smul.addr %s1359, 7
          %s1365 = sadd.s32 %s1360, %s1364
          %s1366 = smul.addr %s1365, 128
          %s1367 = scalar_lea.hbm %s5, %s1366
          %s1368 = sshll.u32 %s1355, 4
          %s1369 = int_to_ptr.vmem [resolvable:$true] %s1368
          %1374 = dma.vmem_to_hbm [thread:$0]  %s1369, 1792, %s1367, %s1352, 896, 896, 56
        $region48: #{tpu_custom_call.1} parent=39 // pred_fallthru
          _
      $region40: #{tpu_custom_call.1} parent=5 // pred_fallthru
        _
      %p1375 = scmp.le.s32.totalorder 2, %s14
      // Predicated region
      $region49: #{tpu_custom_call.1} parent=5 // pred_check
        %p1376 = pneg %p1375
      $region50: #{tpu_custom_call.1} parent=5 // pred_check_branch
        %1378 = sbr.rel (%p1376) target = $region52
      $region51: #{tpu_custom_call.1} parent=5 // pred_region
        %s1379 = ssub.s32 %s14, 2
        // Predicated region
        $region53: #{tpu_custom_call.1} parent=51 // pred_check
          %p1380 = pneg %p177
        $region54: #{tpu_custom_call.1} parent=51 // pred_check_branch
          %1382 = sbr.rel (%p1380) target = $region56
        $region55: #{tpu_custom_call.1} parent=51 // pred_region
          %s1383 = sand.u32 %s162, 1
          %s1384 = scalar_lea.sflag [#allocation4], %s1383
          %s1385 = sand.u32 %s162, 1
          %s1386 = smul.addr %s1385, 112
          %s1387 = scalar_lea.vmem [#allocation3], %s1386
          %1388 = dma.done %s1384, 1792
        $region56: #{tpu_custom_call.1} parent=51 // pred_fallthru
          _
      $region52: #{tpu_custom_call.1} parent=5 // pred_fallthru
        _
    $region6: #{tpu_custom_call.1} parent=1 // loop_footer
      %s18 = sadd.s32 1, %s14
    $region7: #{tpu_custom_call.1} parent=1 // loop_footer_branch
      %13 = sbr.rel target = $region3
    $region8: #{tpu_custom_call.1} parent=1 // loop_exit
      _
    %1389 = vsyncpa [#allocation4], 1
    %s1390 = scalar_lea.sflag [#allocation4], 1
    %1391 = vsyncpa %s1390, 1

</llo_original>
